<compile_context>
chip_gen: v6e
topology: v6e:2x2x1
jax: 0.10.0
libtpu: 0.0.40
codegen_flags: <defaults>
</compile_context>

<pallas_src>
import functools

import jax
import jax.numpy as jnp
from jax.experimental import pallas as pl
from jax.experimental.pallas import tpu as pltpu


_LANE = 128
_SUBLANE = 8
# f32-equivalent (lane-padded) bytes per pipelined input block.
_F32_BLOCK_BUDGET = 6 * 1024 * 1024
# Scoped VMEM limit: <= ~48 MiB is safe on v7x (64 MiB physical) and well
# under v5e/v6e's 128 MiB.
_VMEM_LIMIT = 48 * 1024 * 1024
# Fuse (row-concatenate) same-(D, dtype) tables only when the copy is cheaper
# than an extra kernel launch (a few us of HBM traffic).
_FUSE_BYTES_LIMIT = 8 * 1024 * 1024


def _round_up(x: int, m: int) -> int:
    return (x + m - 1) // m * m


def _emb_margin_kernel(*refs, power, m_rows, tile_r, groups):
    """Accumulate sum(max(row_norm - 1, 0)) over row tiles.

    refs (packed path, groups > 1): seg_ref (128,128), emb_ref (tile_r,128),
        out_ref (1,1,1), acc_ref (tile_r, groups).
    refs (plain path, groups == 1): emb_ref (tile_r, D), out_ref (1,1,1),
        acc_ref (tile_r, 1).
    """
    if groups > 1:
        seg_ref, emb_ref, out_ref, acc_ref = refs
    else:
        emb_ref, out_ref, acc_ref = refs

    i = pl.program_id(1)                      # reduction axis ("arbitrary")
    tiles_per_core = pl.num_programs(1)
    tile_idx = pl.program_id(0) * tiles_per_core + i   # global row-tile index

    @pl.when(i == 0)
    def _():
        acc_ref[...] = jnp.zeros_like(acc_ref)

    # Single bulk upcast to f32 (inputs may be bf16); all accumulation in f32.
    x = emb_ref[...].astype(jnp.float32)
    p = x * x if power == 2 else x ** power

    if groups > 1:
        # Per original-row norms of the lane-packed tile via a fully aligned
        # (tile_r,128) x (128,128) 0/1 segment matmul on the idle MXU; only
        # the first `groups` columns are meaningful.
        norms = jnp.dot(p, seg_ref[...], preferred_element_type=jnp.float32)
        norms = norms[:, :groups]                         # (tile_r, groups)
    else:
        norms = jnp.sum(p, axis=1, keepdims=True)         # (tile_r, 1)

    contrib = jnp.maximum(norms - 1.0, 0.0)

    # Mask rows past the true row count (boundary tile and, on the megacore
    # path, clamped duplicate tiles).  (tile_r, <=groups) compare+select is
    # negligible VPU work, so it is left unconditional.
    row = jax.lax.broadcasted_iota(jnp.int32, contrib.shape, 0) + tile_idx * tile_r
    contrib = jnp.where(row < m_rows, contrib, 0.0)

    acc_ref[...] += contrib

    @pl.when(i == tiles_per_core - 1)
    def _():
        part = jnp.sum(acc_ref[...], axis=0, keepdims=True)   # (1, W)
        part = jnp.sum(part, axis=1, keepdims=True)           # (1, 1)
        out_ref[0] = part


def _single_emb_margin_loss(emb: jax.Array, power: int = 2, *,
                            max_tile_rows: int | None = None) -> jax.Array:
    assert emb.ndim == 2, "EmbMarginLoss expects 2-D embeddings (N, D)"
    n, d = emb.shape
    assert n > 0 and d > 0
    itemsize = jnp.dtype(emb.dtype).itemsize

    # Lane-dense packing for narrow tables: free row-major reshape to width 128.
    packed = (d < _LANE) and (_LANE % d == 0) and (n % (_LANE // d) == 0)
    if packed:
        groups = _LANE // d
        m_rows = n // groups
        width = _LANE
        x = emb.reshape(m_rows, width)          # contiguous reshape: no copy
    else:
        groups = 1
        m_rows = n
        width = d
        x = emb
    # TODO(synk): narrow tables whose N is not a multiple of 128//D fall back
    # to the lane-padded plain path (correct, but only D/128 VMEM-occupied).

    padded_w = _round_up(width, _LANE)          # VMEM lane padding
    tile_r = _F32_BLOCK_BUDGET // (padded_w * 4)
    tile_r = max(_SUBLANE, (tile_r // _SUBLANE) * _SUBLANE)
    tile_r = min(tile_r, _round_up(m_rows, _SUBLANE))
    if max_tile_rows is not None:
        tile_r = min(tile_r, max(_SUBLANE, (max_tile_rows // _SUBLANE) * _SUBLANE))
    # TODO(synk): for extremely wide rows (8 * padded_w * 4 > budget) the
    # minimum 8-row block exceeds the budget; a column-tiled 3-axis grid with
    # a per-row norm accumulator would bound it.

    total_tiles = pl.cdiv(m_rows, tile_r)
    num_par = 2 if total_tiles >= 2 else 1      # feed both TCs on v7x
    tiles_per_core = pl.cdiv(total_tiles, num_par)
    last_tile = total_tiles - 1

    def emb_index_map(c, i):
        # Clamp the few overflow tiles of the last core onto a valid block;
        # their rows are masked out inside the kernel (no double counting).
        return (jnp.minimum(c * tiles_per_core + i, last_tile), 0)

    in_specs = [pl.BlockSpec((tile_r, width), emb_index_map)]
    operands = [x]
    if packed:
        lane = jnp.arange(_LANE, dtype=jnp.int32)
        col = jnp.arange(_LANE, dtype=jnp.int32)
        # Column c is the indicator of "lane belongs to packed group c";
        # columns >= groups are all-zero (harmless).
        seg = ((lane[:, None] // d) == col[None, :]).astype(jnp.float32)
        in_specs = [pl.BlockSpec((_LANE, _LANE), lambda c, i: (0, 0))] + in_specs
        operands = [seg] + operands

    kernel = functools.partial(_emb_margin_kernel, power=power, m_rows=m_rows,
                               tile_r=tile_r, groups=groups)

    out = pl.pallas_call(
        kernel,
        out_shape=jax.ShapeDtypeStruct((num_par, 1, 1), jnp.float32),
        grid=(num_par, tiles_per_core),
        in_specs=in_specs,
        out_specs=pl.BlockSpec((1, 1, 1), lambda c, i: (c, 0, 0)),
        scratch_shapes=[pltpu.VMEM((tile_r, groups), jnp.float32)],
        compiler_params=pltpu.CompilerParams(
            dimension_semantics=("parallel", "arbitrary"),
            vmem_limit_bytes=_VMEM_LIMIT,
        ),
        cost_estimate=pl.CostEstimate(
            flops=3 * n * d + (2 * m_rows * width * _LANE if packed else 0),
            transcendentals=0,
            bytes_accessed=n * d * itemsize + 8 * num_par,
        ),
    )(*operands)

    return jnp.sum(out)


def emb_margin_loss(*embeddings, power: int = 2) -> jax.Array:
    """Pallas EmbMarginLoss: sum over embeddings of sum(max(||row||_p^p - 1, 0))."""
    assert embeddings, "need at least one embedding"
    buckets: dict = {}
    order = []
    for e in embeddings:
        key = (int(e.shape[1]), jnp.dtype(e.dtype).name)
        if key not in buckets:
            buckets[key] = []
            order.append(key)
        buckets[key].append(e)

    total = jnp.float32(0.0)
    for key in order:
        tables = buckets[key]
        group_bytes = sum(int(t.shape[0]) * int(t.shape[1]) * jnp.dtype(t.dtype).itemsize
                          for t in tables)
        if len(tables) > 1 and group_bytes <= _FUSE_BYTES_LIMIT:
            # One launch for many small same-(D, dtype) tables.
            tables = [jnp.concatenate(tables, axis=0)]
        for t in tables:
            total = total + _single_emb_margin_loss(t, power=power)
    return total


def emb_margin_loss_ref(*embeddings, power: int = 2) -> jax.Array:
    loss = jnp.float32(0.0)
    for e in embeddings:
        e32 = e.astype(jnp.float32)
        norm_e = jnp.sum(e32 ** power, axis=1, keepdims=True)
        loss = loss + jnp.sum(jnp.maximum(norm_e - 1.0, 0.0))
    return loss


if __name__ == "__main__":
    key = jax.random.PRNGKey(0)
    k1, k2, k3 = jax.random.split(key, 3)

    # Table 1: f32, D=32 (<128) -> lane-packed path (groups=4), hinge active.
    emb1 = jax.random.normal(k1, (300, 32), dtype=jnp.float32)
    # Table 2: same (D, dtype) as table 1 -> exercises the fused (concat) path.
    emb2 = 0.5 * jax.random.normal(k2, (44, 32), dtype=jnp.float32)
    # Table 3: bf16, D=48 (128 % 48 != 0) -> plain path; norms straddle 1.0 so
    # both hinge branches are exercised.
    emb3 = (0.15 * jax.random.normal(k3, (64, 48), dtype=jnp.float32)).astype(jnp.bfloat16)

    loss = emb_margin_loss(emb1, emb2, emb3)
    jax.block_until_ready(loss)
    ref = emb_margin_loss_ref(emb1, emb2, emb3)
    assert jnp.allclose(loss, ref, rtol=1e-4, atol=1e-4), (loss, ref)

    # Extra coverage: force tiny tiles so the multi-tile / dual-core-slot /
    # clamped-duplicate / boundary-mask code paths all execute.
    small_packed = _single_emb_margin_loss(emb1, power=2, max_tile_rows=16)
    ref1 = emb_margin_loss_ref(emb1)
    assert jnp.allclose(small_packed, ref1, rtol=1e-4, atol=1e-4), (small_packed, ref1)

    small_plain = _single_emb_margin_loss(emb3, power=2, max_tile_rows=16)
    ref3 = emb_margin_loss_ref(emb3)
    assert jnp.allclose(small_plain, ref3, rtol=1e-4, atol=1e-4), (small_plain, ref3)

    print("KERNEL_OK")
</pallas_src>

<mosaic_0001>
module attributes {stable_mosaic.version = 11 : i64} {
  func.func @_emb_margin_kernel(%arg0: i32, %arg1: i32, %arg2: memref<128x128xf32, #tpu.memory_space<vmem>>, %arg3: memref<88x128xf32, #tpu.memory_space<vmem>>, %arg4: memref<1x1x1xf32, #tpu.memory_space<vmem>>, %arg5: memref<88x4xf32, #tpu.memory_space<vmem>>) attributes {dimension_semantics = [#tpu.dimension_semantics<parallel>, #tpu.dimension_semantics<arbitrary>], iteration_bounds = array<i64: 1, 1>, scalar_prefetch = 0 : i64, scratch_operands = 1 : i64, tpu.core_type = #tpu.core_type<tc>, window_params = [{pipeline_mode = #tpu.pipeline_mode<synchronous>, transform_indices = @transform_0, window_bounds = array<i64: 128, 128>}, {transform_indices = @transform_1, window_bounds = array<i64: 88, 128>}, {transform_indices = @transform_2, window_bounds = array<i64: 1, 1, 1>}]} {
    %c1_i32 = arith.constant 1 : i32
    %0 = arith.muli %arg0, %c1_i32 : i32
    %1 = arith.addi %0, %arg1 : i32
    %c0_i32 = arith.constant 0 : i32
    %2 = arith.cmpi eq, %arg1, %c0_i32 : i32
    %3 = arith.extui %2 : i1 to i32
    %c0_i32_0 = arith.constant 0 : i32
    %4 = arith.cmpi ne, %3, %c0_i32_0 : i32
    scf.if %4 {
      %cst_13 = arith.constant 0.000000e+00 : f32
      %28 = vector.broadcast %cst_13 : f32 to vector<88x4xf32>
      %c0_14 = arith.constant 0 : index
      %c0_15 = arith.constant 0 : index
      %29 = vector.load %arg5[%c0_14, %c0_15] : memref<88x4xf32, #tpu.memory_space<vmem>>, vector<88x4xf32>
      tpu.vector_store %arg5[%c0_14, %c0_15], %28 {strides = array<i32>} : memref<88x4xf32, #tpu.memory_space<vmem>>, vector<88x4xf32>,
    } else {
    }
    %c0 = arith.constant 0 : index
    %c0_1 = arith.constant 0 : index
    %5 = vector.load %arg3[%c0, %c0_1] : memref<88x128xf32, #tpu.memory_space<vmem>>, vector<88x128xf32>
    %6 = arith.mulf %5, %5 : vector<88x128xf32>
    %c0_2 = arith.constant 0 : index
    %c0_3 = arith.constant 0 : index
    %7 = vector.load %arg2[%c0_2, %c0_3] : memref<128x128xf32, #tpu.memory_space<vmem>>, vector<128x128xf32>
    %cst = arith.constant dense<0.000000e+00> : vector<88x128xf32>
    %8 = tpu.matmul %6, %7, %cst {dimension_numbers = #tpu.dot_dimension_numbers<[1], [0], [0], [1], [0, 0, 1, 1], [], []>} : vector<88x128xf32>, vector<128x128xf32>, vector<88x128xf32> -> vector<88x128xf32>
    %9 = vector.extract_strided_slice %8 {offsets = [0, 0], sizes = [88, 4], strides = [1, 1]} : vector<88x128xf32> to vector<88x4xf32>
    %cst_4 = arith.constant 1.000000e+00 : f32
    %10 = vector.broadcast %cst_4 : f32 to vector<88x4xf32>
    %11 = arith.subf %9, %10 : vector<88x4xf32>
    %cst_5 = arith.constant 0.000000e+00 : f32
    %12 = vector.broadcast %cst_5 : f32 to vector<88x4xf32>
    %13 = arith.maximumf %11, %12 : vector<88x4xf32>
    %14 = tpu.iota {dimensions = array<i32: 0>} : vector<88x4xi32>
    %c88_i32 = arith.constant 88 : i32
    %15 = arith.muli %1, %c88_i32 : i32
    %16 = vector.broadcast %15 : i32 to vector<88x4xi32>
    %17 = arith.addi %14, %16 : vector<88x4xi32>
    %c86_i32 = arith.constant 86 : i32
    %18 = vector.broadcast %c86_i32 : i32 to vector<88x4xi32>
    %19 = arith.cmpi slt, %17, %18 : vector<88x4xi32>
    %cst_6 = arith.constant 0.000000e+00 : f32
    %20 = vector.broadcast %cst_6 : f32 to vector<88x4xf32>
    %21 = arith.select %19, %13, %20 : vector<88x4xi1>, vector<88x4xf32>
    %c0_7 = arith.constant 0 : index
    %c0_8 = arith.constant 0 : index
    %22 = vector.load %arg5[%c0_7, %c0_8] : memref<88x4xf32, #tpu.memory_space<vmem>>, vector<88x4xf32>
    %23 = arith.addf %22, %21 : vector<88x4xf32>
    %c0_9 = arith.constant 0 : index
    %c0_10 = arith.constant 0 : index
    %24 = vector.load %arg5[%c0_9, %c0_10] : memref<88x4xf32, #tpu.memory_space<vmem>>, vector<88x4xf32>
    tpu.vector_store %arg5[%c0_9, %c0_10], %23 {strides = array<i32>} : memref<88x4xf32, #tpu.memory_space<vmem>>, vector<88x4xf32>,
    %c0_i32_11 = arith.constant 0 : i32
    %25 = arith.cmpi eq, %arg1, %c0_i32_11 : i32
    %26 = arith.extui %25 : i1 to i32
    %c0_i32_12 = arith.constant 0 : i32
    %27 = arith.cmpi ne, %26, %c0_i32_12 : i32
    scf.if %27 {
      %c0_13 = arith.constant 0 : index
      %c0_14 = arith.constant 0 : index
      %28 = vector.load %arg5[%c0_13, %c0_14] : memref<88x4xf32, #tpu.memory_space<vmem>>, vector<88x4xf32>
      %cst_15 = arith.constant dense<0.000000e+00> : vector<4xf32>
      %29 = vector.multi_reduction <add>, %28, %cst_15 [0] : vector<88x4xf32> to vector<4xf32>
      %30 = vector.shape_cast %29 : vector<4xf32> to vector<1x4xf32>
      %cst_16 = arith.constant dense<0.000000e+00> : vector<1xf32>
      %31 = vector.multi_reduction <add>, %30, %cst_16 [1] : vector<1x4xf32> to vector<1xf32>
      %32 = vector.shape_cast %31 : vector<1xf32> to vector<1x1xf32>
      %c0_17 = arith.constant 0 : index
      %c0_18 = arith.constant 0 : index
      %c0_19 = arith.constant 0 : index
      %33 = vector.load %arg4[%c0_17, %c0_18, %c0_19] : memref<1x1x1xf32, #tpu.memory_space<vmem>>, vector<1x1x1xf32>
      %34 = vector.shape_cast %33 : vector<1x1x1xf32> to vector<1x1xf32>
      %35 = vector.shape_cast %32 : vector<1x1xf32> to vector<1x1x1xf32>
      tpu.vector_store %arg4[%c0_17, %c0_18, %c0_19], %35 {strides = array<i32>} : memref<1x1x1xf32, #tpu.memory_space<vmem>>, vector<1x1x1xf32>,
    } else {
    }
    return
  }
  func.func @transform_0(%arg0: i32, %arg1: i32) -> (i32, i32) {
    %c0_i32 = arith.constant 0 : i32
    %c0_i32_0 = arith.constant 0 : i32
    %c0_i32_1 = arith.constant 0 : i32
    return %c0_i32, %c0_i32_0 : i32, i32
  }
  func.func @transform_1(%arg0: i32, %arg1: i32) -> (i32, i32) {
    %c1_i32 = arith.constant 1 : i32
    %0 = arith.muli %arg0, %c1_i32 : i32
    %1 = arith.addi %0, %arg1 : i32
    %c0_i32 = arith.constant 0 : i32
    %2 = arith.minsi %1, %c0_i32 : i32
    %c0_i32_0 = arith.constant 0 : i32
    %c0_i32_1 = arith.constant 0 : i32
    return %2, %c0_i32_0 : i32, i32
  }
  func.func @transform_2(%arg0: i32, %arg1: i32) -> (i32, i32, i32) {
    %c0_i32 = arith.constant 0 : i32
    %c0_i32_0 = arith.constant 0 : i32
    %c0_i32_1 = arith.constant 0 : i32
    return %arg0, %c0_i32, %c0_i32_0 : i32, i32, i32
  }
}

</mosaic_0001>

<llo_original>
// kernel: tpu_custom_call.1
$region0: #{tpu_custom_call.1}
  #allocation0 [shape = 'u32[]', space=smem, size = 0x4, offset = 0x4, fixed_abs, tag = 'smem constant byte address 0x4 - core index']
  #allocation1 [shape = 'u32[144,128]{1,0:T(1,128)}', space=vmem, size = 0x12000, scoped, tag = 'internal scratch']
  #allocation2 [shape = 'f32[88,4]{1,0:T(8,128)}', space=vmem, size = 0xb000, scoped, tag = 'scratch operand']
  %s0 = inlined_call_operand.hbm [shape: f32[128,128], index: 0, kind: input, shape index: {}]
  %s1 = inlined_call_operand.hbm [shape: f32[86,128], index: 1, kind: input, shape index: {}]
  %s2 = inlined_call_operand.hbm [shape: f32[1,1,1], index: 2, kind: output, shape index: {}]
  %s3 = sld [smem:[#allocation0]]
  $region34: #{tpu_custom_call.1} parent=0
    _
  %s5 = ssub.s32 1, %s3
  %s6 = scalar_select 0, %s5, %s3
  $region1: #{tpu_custom_call.1} parent=0
    #allocation3 [shape = 'u8[65536]{0}', space=vmem, size = 0x10000, scoped, tag = 'input window, operand 0, single buffered']
    #allocation4 [shape = 's32[1]{0}', space=sflag, size = 0x4, scoped, tag = 'scoped memory for tpu_custom_call.1']
    #allocation5 [shape = 's32[1]{0}', space=sflag, size = 0x4, scoped, tag = 'scoped memory for tpu_custom_call.1']
    #allocation6 [shape = 'u8[45056]{0}', space=vmem, size = 0xb000, scoped, tag = 'input window, operand 1, single buffered']
    #allocation7 [shape = 's32[1]{0}', space=sflag, size = 0x4, scoped, tag = 'scoped memory for tpu_custom_call.1']
    #allocation8 [shape = 'u8[512]{0}', space=vmem, size = 0x400, scoped, tag = 'output window, operand 0, single buffered']
    %7 = vsyncpa [#allocation4], 0
    %8 = vsyncpa [#allocation7], 0
    %9 = vsyncpa [#allocation5], 0
    // Predicated region
    $region2: #{tpu_custom_call.1} parent=1 // pred_check
      _
    $region3: #{tpu_custom_call.1} parent=1 // pred_check_branch
      %11 = sbr.rel (0) target = $region5
    $region4: #{tpu_custom_call.1} parent=1 // pred_region
      %s13 = ssub.s32 2048, 2048
      %14 = vsyncadd [#allocation4], %s13
      %s15 = sshll.u32 [#allocation3], 4
      %s16 = int_to_ptr.vmem [resolvable:$true] %s15
      %21 = dma.hbm_to_vmem [thread:$0]  %s0, 2048, %s16, [#allocation4], 128, 128, 8
    $region5: #{tpu_custom_call.1} parent=1 // pred_fallthru
      _
    // Predicated region
    $region6: #{tpu_custom_call.1} parent=1 // pred_check
      _
    $region7: #{tpu_custom_call.1} parent=1 // pred_check_branch
      %23 = sbr.rel (0) target = $region9
    $region8: #{tpu_custom_call.1} parent=1 // pred_region
      %s24 = sadd.s32 0, 0
      %p25 = scmp.lt.s32.totalorder %s24, 0
      %s26 = scalar_select %p25, %s24, 0
      %s27 = smul.u32 11, %s26
      %s29 = ssub.s32 1408, 1408
      %30 = vsyncadd [#allocation7], %s29
      %s31 = smul.addr %s27, 128
      %s32 = scalar_lea.hbm %s1, %s31
      %s33 = sshll.u32 [#allocation6], 4
      %s34 = int_to_ptr.vmem [resolvable:$true] %s33
      %39 = dma.hbm_to_vmem [thread:$0]  %s32, 1408, %s34, [#allocation7], 128, 128, 8
    $region9: #{tpu_custom_call.1} parent=1 // pred_fallthru
      _
    // Predicated region
    $region10: #{tpu_custom_call.1} parent=1 // pred_check
      _
    $region11: #{tpu_custom_call.1} parent=1 // pred_check_branch
      %41 = sbr.rel (0) target = $region13
    $region12: #{tpu_custom_call.1} parent=1 // pred_region
      %42 = dma.done [#allocation4], 2048
    $region13: #{tpu_custom_call.1} parent=1 // pred_fallthru
      _
    // Predicated region
    $region14: #{tpu_custom_call.1} parent=1 // pred_check
      _
    $region15: #{tpu_custom_call.1} parent=1 // pred_check_branch
      %44 = sbr.rel (0) target = $region17
    $region16: #{tpu_custom_call.1} parent=1 // pred_region
      %45 = dma.done [#allocation7], 1408
    $region17: #{tpu_custom_call.1} parent=1 // pred_fallthru
      _
    %s46 = sadd.s32 0, 0
    %p47 = scmp.lt.s32.totalorder %s46, 0
    %s48 = scalar_select %p47, %s46, 0
    %s49 = smul.u32 11, %s48
    %s50 = sadd.s32 0, 0
    %p51 = scmp.eq.s32.totalorder 0, 0
    // Predicated region
    $region18: #{tpu_custom_call.1} parent=1 // pred_check
      %p52 = pneg %p51
    $region19: #{tpu_custom_call.1} parent=1 // pred_check_branch
      %54 = sbr.rel (%p52) target = $region21
    $region20: #{tpu_custom_call.1} parent=1 // pred_region
      %vm55 = vcmask 31744
      %56 = vst.msk [vmem:[#allocation2] sm:$0xff] %vm55, 0.0
      %57 = vst.msk [vmem:[#allocation2 + $0x8] sm:$0xff] %vm55, 0.0
      %58 = vst.msk [vmem:[#allocation2 + $0x10] sm:$0xff] %vm55, 0.0
      %59 = vst.msk [vmem:[#allocation2 + $0x18] sm:$0xff] %vm55, 0.0
      %60 = vst.msk [vmem:[#allocation2 + $0x20] sm:$0xff] %vm55, 0.0
      %61 = vst.msk [vmem:[#allocation2 + $0x28] sm:$0xff] %vm55, 0.0
      %62 = vst.msk [vmem:[#allocation2 + $0x30] sm:$0xff] %vm55, 0.0
      %63 = vst.msk [vmem:[#allocation2 + $0x38] sm:$0xff] %vm55, 0.0
      %64 = vst.msk [vmem:[#allocation2 + $0x40] sm:$0xff] %vm55, 0.0
      %65 = vst.msk [vmem:[#allocation2 + $0x48] sm:$0xff] %vm55, 0.0
      %66 = vst.msk [vmem:[#allocation2 + $0x50] sm:$0xff] %vm55, 0.0
    $region21: #{tpu_custom_call.1} parent=1 // pred_fallthru
      _
    %v67 = vld [vmem:[#allocation6] sm:$0xff]
    %v68 = vld [vmem:[#allocation6 + $0x8] sm:$0xff]
    %v69 = vld [vmem:[#allocation6 + $0x10] sm:$0xff]
    %v70 = vld [vmem:[#allocation6 + $0x18] sm:$0xff]
    %v71 = vld [vmem:[#allocation6 + $0x20] sm:$0xff]
    %v72 = vld [vmem:[#allocation6 + $0x28] sm:$0xff]
    %v73 = vld [vmem:[#allocation6 + $0x30] sm:$0xff]
    %v74 = vld [vmem:[#allocation6 + $0x38] sm:$0xff]
    %v75 = vld [vmem:[#allocation6 + $0x40] sm:$0xff]
    %v76 = vld [vmem:[#allocation6 + $0x48] sm:$0xff]
    %v77 = vld [vmem:[#allocation6 + $0x50] sm:$0xff]
    %v78 = vmul.f32 %v67, %v67
    %v79 = vmul.f32 %v68, %v68
    %v80 = vmul.f32 %v69, %v69
    %v81 = vmul.f32 %v70, %v70
    %v82 = vmul.f32 %v71, %v71
    %v83 = vmul.f32 %v72, %v72
    %v84 = vmul.f32 %v73, %v73
    %v85 = vmul.f32 %v74, %v74
    %v86 = vmul.f32 %v75, %v75
    %v87 = vmul.f32 %v76, %v76
    %v88 = vmul.f32 %v77, %v77
    %v89 = vld [vmem:[#allocation3] sm:$0xff]
    %v90 = vld [vmem:[#allocation3 + $0x8] sm:$0xff]
    %v91 = vld [vmem:[#allocation3 + $0x10] sm:$0xff]
    %v92 = vld [vmem:[#allocation3 + $0x18] sm:$0xff]
    %v93 = vld [vmem:[#allocation3 + $0x20] sm:$0xff]
    %v94 = vld [vmem:[#allocation3 + $0x28] sm:$0xff]
    %v95 = vld [vmem:[#allocation3 + $0x30] sm:$0xff]
    %v96 = vld [vmem:[#allocation3 + $0x38] sm:$0xff]
    %v97 = vld [vmem:[#allocation3 + $0x40] sm:$0xff]
    %v98 = vld [vmem:[#allocation3 + $0x48] sm:$0xff]
    %v99 = vld [vmem:[#allocation3 + $0x50] sm:$0xff]
    %v100 = vld [vmem:[#allocation3 + $0x58] sm:$0xff]
    %v101 = vld [vmem:[#allocation3 + $0x60] sm:$0xff]
    %v102 = vld [vmem:[#allocation3 + $0x68] sm:$0xff]
    %v103 = vld [vmem:[#allocation3 + $0x70] sm:$0xff]
    %v104 = vld [vmem:[#allocation3 + $0x78] sm:$0xff]
    %105 = vmatprep.subr.mxu0 0.0
    %106 = vmatpush1.msra.mxu0 %v104
    %107 = vmatprep.subr.mxu0 0.0
    %108 = vmatpush1.msra.mxu0 %v103
    %109 = vmatprep.subr.mxu0 0.0
    %110 = vmatpush1.msra.mxu0 %v102
    %111 = vmatprep.subr.mxu0 0.0
    %112 = vmatpush1.msra.mxu0 %v101
    %113 = vmatprep.subr.mxu0 0.0
    %114 = vmatpush1.msra.mxu0 %v100
    %115 = vmatprep.subr.mxu0 0.0
    %116 = vmatpush1.msra.mxu0 %v99
    %117 = vmatprep.subr.mxu0 0.0
    %118 = vmatpush1.msra.mxu0 %v98
    %119 = vmatprep.subr.mxu0 0.0
    %120 = vmatpush1.msra.mxu0 %v97
    %121 = vmatprep.subr.mxu0 0.0
    %122 = vmatpush1.msra.mxu0 %v96
    %123 = vmatprep.subr.mxu0 0.0
    %124 = vmatpush1.msra.mxu0 %v95
    %125 = vmatprep.subr.mxu0 0.0
    %126 = vmatpush1.msra.mxu0 %v94
    %127 = vmatprep.subr.mxu0 0.0
    %128 = vmatpush1.msra.mxu0 %v93
    %129 = vmatprep.subr.mxu0 0.0
    %130 = vmatpush1.msra.mxu0 %v92
    %131 = vmatprep.subr.mxu0 0.0
    %132 = vmatpush1.msra.mxu0 %v91
    %133 = vmatprep.subr.mxu0 0.0
    %134 = vmatpush1.msra.mxu0 %v90
    %135 = vmatprep.subr.mxu0 0.0
    %136 = vmatpush1.msra.mxu0 %v89
    %137 = vmatprep.subr.mxu0 0.0
    %138 = vmatpush2.msra.mxu0 0.0
    %139 = vmatprep.subr.mxu0 0.0
    %140 = vmatpush2.msra.mxu0 0.0
    %141 = vmatprep.subr.mxu0 0.0
    %142 = vmatpush2.msra.mxu0 0.0
    %143 = vmatprep.subr.mxu0 0.0
    %144 = vmatpush2.msra.mxu0 0.0
    %145 = vmatprep.subr.mxu0 0.0
    %146 = vmatpush2.msra.mxu0 0.0
    %147 = vmatprep.subr.mxu0 0.0
    %148 = vmatpush2.msra.mxu0 0.0
    %149 = vmatprep.subr.mxu0 0.0
    %150 = vmatpush2.msra.mxu0 0.0
    %151 = vmatprep.subr.mxu0 0.0
    %152 = vmatpush2.msra.mxu0 0.0
    %153 = vmatprep.subr.mxu0 0.0
    %154 = vmatpush2.msra.mxu0 0.0
    %155 = vmatprep.subr.mxu0 0.0
    %156 = vmatpush2.msra.mxu0 0.0
    %157 = vmatprep.subr.mxu0 0.0
    %158 = vmatpush2.msra.mxu0 0.0
    %159 = vmatprep.subr.mxu0 0.0
    %160 = vmatpush2.msra.mxu0 0.0
    %161 = vmatprep.subr.mxu0 0.0
    %162 = vmatpush2.msra.mxu0 0.0
    %163 = vmatprep.subr.mxu0 0.0
    %164 = vmatpush2.msra.mxu0 0.0
    %165 = vmatprep.subr.mxu0 0.0
    %166 = vmatpush2.msra.mxu0 0.0
    %167 = vmatprep.subr.mxu0 0.0
    %168 = vmatpush2.msra.mxu0 0.0
    %169 = vmatprep.mubr.f32.mxu0 0.0
    %170 = vmatmul.mubr.f32.gmra.mxu0 %v78
    %v171 = vpop.f32.mrf.mxu0
    %v172 = vadd.f32 0.0, %v171
    %v173 = vpop.f32.mrf.mxu0
    %174 = vmatprep.mubr.f32.mxu0 0.0
    %175 = vmatmul.mubr.f32.gmra.mxu0 %v79
    %v176 = vpop.f32.mrf.mxu0
    %v177 = vadd.f32 0.0, %v176
    %v178 = vpop.f32.mrf.mxu0
    %179 = vmatprep.mubr.f32.mxu0 0.0
    %180 = vmatmul.mubr.f32.gmra.mxu0 %v80
    %v181 = vpop.f32.mrf.mxu0
    %v182 = vadd.f32 0.0, %v181
    %v183 = vpop.f32.mrf.mxu0
    %184 = vmatprep.mubr.f32.mxu0 0.0
    %185 = vmatmul.mubr.f32.gmra.mxu0 %v81
    %v186 = vpop.f32.mrf.mxu0
    %v187 = vadd.f32 0.0, %v186
    %v188 = vpop.f32.mrf.mxu0
    %189 = vmatprep.mubr.f32.mxu0 0.0
    %190 = vmatmul.mubr.f32.gmra.mxu0 %v82
    %v191 = vpop.f32.mrf.mxu0
    %v192 = vadd.f32 0.0, %v191
    %v193 = vpop.f32.mrf.mxu0
    %194 = vmatprep.mubr.f32.mxu0 0.0
    %195 = vmatmul.mubr.f32.gmra.mxu0 %v83
    %v196 = vpop.f32.mrf.mxu0
    %v197 = vadd.f32 0.0, %v196
    %v198 = vpop.f32.mrf.mxu0
    %199 = vmatprep.mubr.f32.mxu0 0.0
    %200 = vmatmul.mubr.f32.gmra.mxu0 %v84
    %v201 = vpop.f32.mrf.mxu0
    %v202 = vadd.f32 0.0, %v201
    %v203 = vpop.f32.mrf.mxu0
    %204 = vmatprep.mubr.f32.mxu0 0.0
    %205 = vmatmul.mubr.f32.gmra.mxu0 %v85
    %v206 = vpop.f32.mrf.mxu0
    %v207 = vadd.f32 0.0, %v206
    %v208 = vpop.f32.mrf.mxu0
    %209 = vmatprep.mubr.f32.mxu0 0.0
    %210 = vmatmul.mubr.f32.gmra.mxu0 %v86
    %v211 = vpop.f32.mrf.mxu0
    %v212 = vadd.f32 0.0, %v211
    %v213 = vpop.f32.mrf.mxu0
    %214 = vmatprep.mubr.f32.mxu0 0.0
    %215 = vmatmul.mubr.f32.gmra.mxu0 %v87
    %v216 = vpop.f32.mrf.mxu0
    %v217 = vadd.f32 0.0, %v216
    %v218 = vpop.f32.mrf.mxu0
    %219 = vmatprep.mubr.f32.mxu0 0.0
    %220 = vmatmul.mubr.f32.gmra.mxu0 %v88
    %v221 = vpop.f32.mrf.mxu0
    %v222 = vadd.f32 0.0, %v221
    %v223 = vpop.f32.mrf.mxu0
    %224 = vdwg.mxu0
    %v225 = vsub.f32 %v172, 1.0
    %v226 = vsub.f32 %v177, 1.0
    %v227 = vsub.f32 %v182, 1.0
    %v228 = vsub.f32 %v187, 1.0
    %v229 = vsub.f32 %v192, 1.0
    %v230 = vsub.f32 %v197, 1.0
    %v231 = vsub.f32 %v202, 1.0
    %v232 = vsub.f32 %v207, 1.0
    %v233 = vsub.f32 %v212, 1.0
    %v234 = vsub.f32 %v217, 1.0
    %v235 = vsub.f32 %v222, 1.0
    %v236 = vmax.f32 %v225, 0.0
    %v237 = vmax.f32 %v226, 0.0
    %v238 = vmax.f32 %v227, 0.0
    %v239 = vmax.f32 %v228, 0.0
    %v240 = vmax.f32 %v229, 0.0
    %v241 = vmax.f32 %v230, 0.0
    %v242 = vmax.f32 %v231, 0.0
    %v243 = vmax.f32 %v232, 0.0
    %v244 = vmax.f32 %v233, 0.0
    %v245 = vmax.f32 %v234, 0.0
    %v246 = vmax.f32 %v235, 0.0
    %v247 = vlaneseq
    %v248 = vshrl.u32 %v247, 7
    %v249 = vadd.s32 %v248, 8
    %v250 = vadd.s32 %v248, 16
    %v251 = vadd.s32 %v248, 24
    %v252 = vadd.s32 %v248, 32
    %v253 = vadd.s32 %v248, 40
    %v254 = vadd.s32 %v248, 48
    %v255 = vadd.s32 %v248, 56
    %v256 = vadd.s32 %v248, 64
    %v257 = vadd.s32 %v248, 72
    %v258 = vadd.s32 %v248, 80
    %s259 = smul.u32 %s50, 88
    %v260 = vstv %s259
    %v261 = vadd.s32 %v248, %v260
    %v262 = vadd.s32 %v249, %v260
    %v263 = vadd.s32 %v250, %v260
    %v264 = vadd.s32 %v251, %v260
    %v265 = vadd.s32 %v252, %v260
    %v266 = vadd.s32 %v253, %v260
    %v267 = vadd.s32 %v254, %v260
    %v268 = vadd.s32 %v255, %v260
    %v269 = vadd.s32 %v256, %v260
    %v270 = vadd.s32 %v257, %v260
    %v271 = vadd.s32 %v258, %v260
    %vm272 = vcmp.lt.s32.totalorder %v261, 86
    %vm273 = vcmp.lt.s32.totalorder %v262, 86
    %vm274 = vcmp.lt.s32.totalorder %v263, 86
    %vm275 = vcmp.lt.s32.totalorder %v264, 86
    %vm276 = vcmp.lt.s32.totalorder %v265, 86
    %vm277 = vcmp.lt.s32.totalorder %v266, 86
    %vm278 = vcmp.lt.s32.totalorder %v267, 86
    %vm279 = vcmp.lt.s32.totalorder %v268, 86
    %vm280 = vcmp.lt.s32.totalorder %v269, 86
    %vm281 = vcmp.lt.s32.totalorder %v270, 86
    %vm282 = vcmp.lt.s32.totalorder %v271, 86
    %v283 = vsel %vm272, %v236, 0.0
    %v284 = vsel %vm273, %v237, 0.0
    %v285 = vsel %vm274, %v238, 0.0
    %v286 = vsel %vm275, %v239, 0.0
    %v287 = vsel %vm276, %v240, 0.0
    %v288 = vsel %vm277, %v241, 0.0
    %v289 = vsel %vm278, %v242, 0.0
    %v290 = vsel %vm279, %v243, 0.0
    %v291 = vsel %vm280, %v244, 0.0
    %v292 = vsel %vm281, %v245, 0.0
    %v293 = vsel %vm282, %v246, 0.0
    %v294 = vld [vmem:[#allocation2] sm:$0xff]
    %v295 = vld [vmem:[#allocation2 + $0x8] sm:$0xff]
    %v296 = vld [vmem:[#allocation2 + $0x10] sm:$0xff]
    %v297 = vld [vmem:[#allocation2 + $0x18] sm:$0xff]
    %v298 = vld [vmem:[#allocation2 + $0x20] sm:$0xff]
    %v299 = vld [vmem:[#allocation2 + $0x28] sm:$0xff]
    %v300 = vld [vmem:[#allocation2 + $0x30] sm:$0xff]
    %v301 = vld [vmem:[#allocation2 + $0x38] sm:$0xff]
    %v302 = vld [vmem:[#allocation2 + $0x40] sm:$0xff]
    %v303 = vld [vmem:[#allocation2 + $0x48] sm:$0xff]
    %v304 = vld [vmem:[#allocation2 + $0x50] sm:$0xff]
    %v305 = vadd.f32 %v294, %v283
    %v306 = vadd.f32 %v295, %v284
    %v307 = vadd.f32 %v296, %v285
    %v308 = vadd.f32 %v297, %v286
    %v309 = vadd.f32 %v298, %v287
    %v310 = vadd.f32 %v299, %v288
    %v311 = vadd.f32 %v300, %v289
    %v312 = vadd.f32 %v301, %v290
    %v313 = vadd.f32 %v302, %v291
    %v314 = vadd.f32 %v303, %v292
    %v315 = vadd.f32 %v304, %v293
    %vm316 = vcmask 31744
    %317 = vst.msk [vmem:[#allocation2] sm:$0xff] %vm316, %v305
    %318 = vst.msk [vmem:[#allocation2 + $0x8] sm:$0xff] %vm316, %v306
    %319 = vst.msk [vmem:[#allocation2 + $0x10] sm:$0xff] %vm316, %v307
    %320 = vst.msk [vmem:[#allocation2 + $0x18] sm:$0xff] %vm316, %v308
    %321 = vst.msk [vmem:[#allocation2 + $0x20] sm:$0xff] %vm316, %v309
    %322 = vst.msk [vmem:[#allocation2 + $0x28] sm:$0xff] %vm316, %v310
    %323 = vst.msk [vmem:[#allocation2 + $0x30] sm:$0xff] %vm316, %v311
    %324 = vst.msk [vmem:[#allocation2 + $0x38] sm:$0xff] %vm316, %v312
    %325 = vst.msk [vmem:[#allocation2 + $0x40] sm:$0xff] %vm316, %v313
    %326 = vst.msk [vmem:[#allocation2 + $0x48] sm:$0xff] %vm316, %v314
    %327 = vst.msk [vmem:[#allocation2 + $0x50] sm:$0xff] %vm316, %v315
    // Predicated region
    $region22: #{tpu_custom_call.1} parent=1 // pred_check
      %p328 = pneg %p51
    $region23: #{tpu_custom_call.1} parent=1 // pred_check_branch
      %330 = sbr.rel (%p328) target = $region25
    $region24: #{tpu_custom_call.1} parent=1 // pred_region
      %v331 = vld [vmem:[#allocation2] sm:$0xff]
      %v332 = vld [vmem:[#allocation2 + $0x8] sm:$0xff]
      %v333 = vld [vmem:[#allocation2 + $0x10] sm:$0xff]
      %v334 = vld [vmem:[#allocation2 + $0x18] sm:$0xff]
      %v335 = vld [vmem:[#allocation2 + $0x20] sm:$0xff]
      %v336 = vld [vmem:[#allocation2 + $0x28] sm:$0xff]
      %v337 = vld [vmem:[#allocation2 + $0x30] sm:$0xff]
      %v338 = vld [vmem:[#allocation2 + $0x38] sm:$0xff]
      %v339 = vld [vmem:[#allocation2 + $0x40] sm:$0xff]
      %v340 = vld [vmem:[#allocation2 + $0x48] sm:$0xff]
      %v341 = vld [vmem:[#allocation2 + $0x50] sm:$0xff]
      %v342 = vsel %vm316, %v331, 0.0
      %v343 = vsel %vm316, %v332, 0.0
      %v344 = vadd.f32 %v342, %v343
      %v345 = vsel %vm316, %v333, 0.0
      %v346 = vadd.f32 %v344, %v345
      %v347 = vsel %vm316, %v334, 0.0
      %v348 = vadd.f32 %v346, %v347
      %v349 = vsel %vm316, %v335, 0.0
      %v350 = vadd.f32 %v348, %v349
      %v351 = vsel %vm316, %v336, 0.0
      %v352 = vadd.f32 %v350, %v351
      %v353 = vsel %vm316, %v337, 0.0
      %v354 = vadd.f32 %v352, %v353
      %v355 = vsel %vm316, %v338, 0.0
      %v356 = vadd.f32 %v354, %v355
      %v357 = vsel %vm316, %v339, 0.0
      %v358 = vadd.f32 %v356, %v357
      %v359 = vsel %vm316, %v340, 0.0
      %v360 = vadd.f32 %v358, %v359
      %v361 = vsel %vm316, %v341, 0.0
      %v362 = vadd.f32 %v360, %v361
      %v363 = vrot.slane %v362, 4
      %v364 = vadd.f32 %v362, %v363
      %v365 = vrot.slane %v364, 2
      %v366 = vadd.f32 %v364, %v365
      %v367 = vrot.slane %v366, 1
      %v368 = vadd.f32 %v366, %v367
      %v369 = vsel %vm316, %v368, 0.0
      %370 = vadd.xlane.f32.xlu0 %v369
      %v371 = vpop.xlane.xlu0 %370
      %vm372 = vcmask 0
      %373 = vst.msk [vmem:[#allocation8] sm:$0x1] %vm372, %v371
    $region25: #{tpu_custom_call.1} parent=1 // pred_fallthru
      _
    // Predicated region
    $region26: #{tpu_custom_call.1} parent=1 // pred_check
      _
    $region27: #{tpu_custom_call.1} parent=1 // pred_check_branch
      %375 = sbr.rel (0) target = $region29
    $region28: #{tpu_custom_call.1} parent=1 // pred_region
      %s377 = ssub.s32 16, 16
      %378 = vsyncadd [#allocation5], %s377
      %s380 = sshll.u32 [#allocation8], 4
      %s381 = int_to_ptr.vmem [resolvable:$true] %s380
      %383 = dma.vmem_to_hbm [thread:$0]  %s381, 16, %s2, [#allocation5]
    $region29: #{tpu_custom_call.1} parent=1 // pred_fallthru
      _
    // Predicated region
    $region30: #{tpu_custom_call.1} parent=1 // pred_check
      _
    $region31: #{tpu_custom_call.1} parent=1 // pred_check_branch
      %385 = sbr.rel (0) target = $region33
    $region32: #{tpu_custom_call.1} parent=1 // pred_region
      %386 = dma.done [#allocation5], 16
    $region33: #{tpu_custom_call.1} parent=1 // pred_fallthru
      _
    %387 = vsyncpa [#allocation4], 1
    %388 = vsyncpa [#allocation7], 1
    %389 = vsyncpa [#allocation5], 1

</llo_original>
